<compile_context>
chip_gen: v6e
topology: v6e:2x2x1
jax: 0.10.0
libtpu: 0.0.40
codegen_flags: <defaults>
</compile_context>

<pallas_src>
import jax
import jax.numpy as jnp
from jax.experimental import pallas as pl
from jax.experimental.pallas import tpu as pltpu


def _embedding_kernel(idx_ref, table_ref, out_ref):
    # idx_ref:   [B, 1] int32   (VMEM)
    # table_ref: [V, D] float   (VMEM)
    # out_ref:   [B, D] float   (VMEM)
    B, D = out_ref.shape
    V = table_ref.shape[0]

    idx = idx_ref[...]                                  # [B, 1] int32
    idx_b = jnp.broadcast_to(idx, (B, D))               # single hoisted broadcast
    table = table_ref[...]                              # [V, D] (tiny, one load)

    # Init from row 0; V is tiny (2**num_classes == 4) -> unrolled VPU selects.
    acc = jnp.broadcast_to(table[0:1, :], (B, D))
    for v in range(1, V):
        acc = jnp.where(idx_b == v, table[v:v + 1, :], acc)

    out_ref[...] = acc


def multi_label_embedder_forward(condition, embedding_table):
    """condition: int [B]; embedding_table: [2**num_classes, emb_dim].

    Returns [B, emb_dim] with out[b] = embedding_table[condition[b]],
    matching torch.nn.Embedding forward semantics (output dtype = weight dtype).
    """
    B = condition.shape[0]
    V, D = embedding_table.shape

    idx2d = condition.astype(jnp.int32).reshape(B, 1)

    # TODO(synk): in a full model, fuse this 4-way select into the consuming
    # kernel (or use plain table[condition]) instead of a standalone dispatch.
    out = pl.pallas_call(
        _embedding_kernel,
        out_shape=jax.ShapeDtypeStruct((B, D), embedding_table.dtype),
        in_specs=[
            pl.BlockSpec(memory_space=pltpu.MemorySpace.VMEM),
            pl.BlockSpec(memory_space=pltpu.MemorySpace.VMEM),
        ],
        out_specs=pl.BlockSpec(memory_space=pltpu.MemorySpace.VMEM),
    )(idx2d, embedding_table)

    return out


def make_params(emb_dim=32, num_classes=2, key=None):
    """nn.Embedding(2**num_classes, emb_dim) weight, N(0,1) init like torch."""
    if key is None:
        key = jax.random.PRNGKey(0)
    vocab = 2 ** num_classes
    return jax.random.normal(key, (vocab, emb_dim), dtype=jnp.float32)


if __name__ == "__main__":
    emb_dim = 32
    num_classes = 2
    batch = 8

    key = jax.random.PRNGKey(0)
    k_tab, k_idx = jax.random.split(key)

    table = make_params(emb_dim=emb_dim, num_classes=num_classes, key=k_tab)
    condition = jax.random.randint(
        k_idx, (batch,), 0, 2 ** num_classes, dtype=jnp.int32
    )

    out = multi_label_embedder_forward(condition, table)
    out = jax.block_until_ready(out)

    # Reference: plain JAX gather (== torch embedding lookup semantics).
    ref = table[condition]
    assert out.shape == (batch, emb_dim)
    assert out.dtype == table.dtype
    assert jnp.allclose(out, ref, atol=1e-6), "mismatch vs reference gather"

    print("KERNEL_OK")
</pallas_src>

<mosaic_0001>
module attributes {stable_mosaic.version = 11 : i64} {
  func.func @_embedding_kernel(%arg0: memref<8x1xi32, #tpu.memory_space<vmem>>, %arg1: memref<4x32xf32, #tpu.memory_space<vmem>>, %arg2: memref<8x32xf32, #tpu.memory_space<vmem>>) attributes {dimension_semantics = [], scalar_prefetch = 0 : i64, scratch_operands = 0 : i64, tpu.core_type = #tpu.core_type<tc>} {
    %c0 = arith.constant 0 : index
    %c0_0 = arith.constant 0 : index
    %0 = vector.load %arg0[%c0, %c0_0] : memref<8x1xi32, #tpu.memory_space<vmem>>, vector<8x1xi32>
    %1 = vector.shape_cast %0 : vector<8x1xi32> to vector<8x1xi32>
    %2 = vector.broadcast %1 : vector<8x1xi32> to vector<8x32xi32>
    %c0_1 = arith.constant 0 : index
    %c0_2 = arith.constant 0 : index
    %3 = vector.load %arg1[%c0_1, %c0_2] : memref<4x32xf32, #tpu.memory_space<vmem>>, vector<4x32xf32>
    %4 = vector.extract_strided_slice %3 {offsets = [0, 0], sizes = [1, 32], strides = [1, 1]} : vector<4x32xf32> to vector<1x32xf32>
    %5 = vector.shape_cast %4 : vector<1x32xf32> to vector<1x32xf32>
    %6 = vector.broadcast %5 : vector<1x32xf32> to vector<8x32xf32>
    %c1_i32 = arith.constant 1 : i32
    %7 = vector.broadcast %c1_i32 : i32 to vector<8x32xi32>
    %8 = arith.cmpi eq, %2, %7 : vector<8x32xi32>
    %9 = vector.extract_strided_slice %3 {offsets = [1, 0], sizes = [1, 32], strides = [1, 1]} : vector<4x32xf32> to vector<1x32xf32>
    %10 = vector.shape_cast %9 : vector<1x32xf32> to vector<1x32xf32>
    %11 = vector.broadcast %10 : vector<1x32xf32> to vector<8x32xf32>
    %12 = arith.select %8, %11, %6 : vector<8x32xi1>, vector<8x32xf32>
    %c2_i32 = arith.constant 2 : i32
    %13 = vector.broadcast %c2_i32 : i32 to vector<8x32xi32>
    %14 = arith.cmpi eq, %2, %13 : vector<8x32xi32>
    %15 = vector.extract_strided_slice %3 {offsets = [2, 0], sizes = [1, 32], strides = [1, 1]} : vector<4x32xf32> to vector<1x32xf32>
    %16 = vector.shape_cast %15 : vector<1x32xf32> to vector<1x32xf32>
    %17 = vector.broadcast %16 : vector<1x32xf32> to vector<8x32xf32>
    %18 = arith.select %14, %17, %12 : vector<8x32xi1>, vector<8x32xf32>
    %c3_i32 = arith.constant 3 : i32
    %19 = vector.broadcast %c3_i32 : i32 to vector<8x32xi32>
    %20 = arith.cmpi eq, %2, %19 : vector<8x32xi32>
    %21 = vector.extract_strided_slice %3 {offsets = [3, 0], sizes = [1, 32], strides = [1, 1]} : vector<4x32xf32> to vector<1x32xf32>
    %22 = vector.shape_cast %21 : vector<1x32xf32> to vector<1x32xf32>
    %23 = vector.broadcast %22 : vector<1x32xf32> to vector<8x32xf32>
    %24 = arith.select %20, %23, %18 : vector<8x32xi1>, vector<8x32xf32>
    %c0_3 = arith.constant 0 : index
    %c0_4 = arith.constant 0 : index
    %25 = vector.load %arg2[%c0_3, %c0_4] : memref<8x32xf32, #tpu.memory_space<vmem>>, vector<8x32xf32>
    tpu.vector_store %arg2[%c0_3, %c0_4], %24 {strides = array<i32>} : memref<8x32xf32, #tpu.memory_space<vmem>>, vector<8x32xf32>,
    return
  }
}

</mosaic_0001>

<llo_original>
// kernel: tpu_custom_call.1
$region0: #{tpu_custom_call.1}
  #allocation0 [shape = 'u32[]', space=smem, size = 0x4, offset = 0x4, fixed_abs, tag = 'smem constant byte address 0x4 - core index']
  #allocation1 [shape = 'u32[144,128]{1,0:T(1,128)}', space=vmem, size = 0x12000, scoped, tag = 'internal scratch']
  %s0 = inlined_call_operand.vmem [shape: s32[8,1], index: 0, kind: input, shape index: {}]
  %s1 = inlined_call_operand.vmem [shape: f32[4,32], index: 1, kind: input, shape index: {}]
  %s2 = inlined_call_operand.hbm [shape: f32[8,32], index: 2, kind: output, shape index: {}]
  %s3 = sld [smem:[#allocation0]]
  $region18: #{tpu_custom_call.1} parent=0
    _
  %s5 = ssub.s32 1, %s3
  %s6 = scalar_select 0, %s5, %s3
  $region1: #{tpu_custom_call.1} parent=0
    #allocation2 [shape = 'u8[4096]{0}', space=vmem, size = 0x1000, scoped, tag = 'output window, operand 0, single buffered']
    #allocation3 [shape = 's32[1]{0}', space=sflag, size = 0x4, scoped, tag = 'scoped memory for tpu_custom_call.1']
    %7 = vsyncpa [#allocation3], 0
    // Predicated region
    $region2: #{tpu_custom_call.1} parent=1 // pred_check
      _
    $region3: #{tpu_custom_call.1} parent=1 // pred_check_branch
      %9 = sbr.rel (0) target = $region5
    $region4: #{tpu_custom_call.1} parent=1 // pred_region
      _
    $region5: #{tpu_custom_call.1} parent=1 // pred_fallthru
      _
    // Predicated region
    $region6: #{tpu_custom_call.1} parent=1 // pred_check
      _
    $region7: #{tpu_custom_call.1} parent=1 // pred_check_branch
      %11 = sbr.rel (0) target = $region9
    $region8: #{tpu_custom_call.1} parent=1 // pred_region
      _
    $region9: #{tpu_custom_call.1} parent=1 // pred_fallthru
      _
    %v12 = vld [vmem:[%s0] sm:$0xff]
    %13 = vset.pattern.permute.xlu0 0
    %14 = vperm.xlu0 %13, %v12
    %v15 = vpop.permute.xlu0 %14
    %v16 = vld [vmem:[%s1] sm:$0xf]
    %v17 = vlaneseq
    %v18 = vshrl.u32 %v17, 7
    %v19 = vsub.s32 0, %v18
    %v20 = vrot.slane %v16, %v19
    %vm21 = vcmp.eq.s32.totalorder %v15, 1
    %v22 = vlaneseq
    %v23 = vshrl.u32 %v22, 7
    %v24 = vsub.s32 1, %v23
    %v25 = vrot.slane %v16, %v24
    %v26 = vsel %vm21, %v25, %v20
    %vm27 = vcmp.eq.s32.totalorder %v15, 2
    %v28 = vlaneseq
    %v29 = vshrl.u32 %v28, 7
    %v30 = vsub.s32 2, %v29
    %v31 = vrot.slane %v16, %v30
    %v32 = vsel %vm27, %v31, %v26
    %vm33 = vcmp.eq.s32.totalorder %v15, 3
    %v34 = vlaneseq
    %v35 = vshrl.u32 %v34, 7
    %v36 = vsub.s32 3, %v35
    %v37 = vrot.slane %v16, %v36
    %v38 = vsel %vm33, %v37, %v32
    %vm39 = vcmask 261120
    %40 = vst.msk [vmem:[#allocation2] sm:$0xff] %vm39, %v38
    // Predicated region
    $region10: #{tpu_custom_call.1} parent=1 // pred_check
      _
    $region11: #{tpu_custom_call.1} parent=1 // pred_check_branch
      %42 = sbr.rel (0) target = $region13
    $region12: #{tpu_custom_call.1} parent=1 // pred_region
      %s44 = ssub.s32 128, 128
      %45 = vsyncadd [#allocation3], %s44
      %s47 = sshll.u32 [#allocation2], 4
      %s48 = int_to_ptr.vmem [resolvable:$true] %s47
      %50 = dma.vmem_to_hbm [thread:$0]  %s48, 128, %s2, [#allocation3]
    $region13: #{tpu_custom_call.1} parent=1 // pred_fallthru
      _
    // Predicated region
    $region14: #{tpu_custom_call.1} parent=1 // pred_check
      _
    $region15: #{tpu_custom_call.1} parent=1 // pred_check_branch
      %52 = sbr.rel (0) target = $region17
    $region16: #{tpu_custom_call.1} parent=1 // pred_region
      %53 = dma.done [#allocation3], 128
    $region17: #{tpu_custom_call.1} parent=1 // pred_fallthru
      _
    %54 = vsyncpa [#allocation3], 1

</llo_original>
